<compile_context>
chip_gen: v7x
topology: tpu7x:2x2x1
jax: 0.10.0
libtpu: 0.0.40
codegen_flags: <defaults>
</compile_context>

<pallas_src>
import jax
import jax.numpy as jnp
from jax.experimental import pallas as pl
from jax.experimental.pallas import tpu as pltpu

EPS = 1e-5
_MIB = 1024 * 1024


# ----------------------------------------------------------------------------
# Pallas kernel
# ----------------------------------------------------------------------------
def _layernorm_kernel(x_ref, w_ref, b_ref, o_ref):
    # x_ref: (tile_rows, D) block; w_ref/b_ref: (1, D); o_ref: (tile_rows, D).
    x = x_ref[...].astype(jnp.float32)
    # One sweep over x for both first and second moments (no `centered` temp).
    mean = jnp.mean(x, axis=-1, keepdims=True)
    mean_sq = jnp.mean(x * x, axis=-1, keepdims=True)
    var = mean_sq - mean * mean
    inv = jax.lax.rsqrt(var + EPS)                       # EUP rsqrt (free slot)
    w = w_ref[...].astype(jnp.float32)
    b = b_ref[...].astype(jnp.float32)
    o_ref[...] = ((x - mean) * inv * w + b).astype(o_ref.dtype)


# ----------------------------------------------------------------------------
# Generation-aware VMEM configuration
# ----------------------------------------------------------------------------
def _vmem_config():
    """Return (buffer_budget_bytes, vmem_limit_bytes, num_tensorcores)."""
    try:
        info = pltpu.get_tpu_info()
        vmem_cap = int(getattr(info, "vmem_capacity_bytes", 0)) or 128 * _MIB
    except Exception:
        vmem_cap = 128 * _MIB
    if vmem_cap <= 64 * _MIB:
        # v7x-class: 64 MiB VMEM per TensorCore, 2 TensorCores per chip.
        return 16 * _MIB, 48 * _MIB, 2
    # v5e / v6e-class: 128 MiB VMEM, single TensorCore.
    return 48 * _MIB, 96 * _MIB, 1


def _choose_tile_rows(n_rows, d, itemsize, buf_budget, num_cores):
    """Largest sublane-aligned row tile whose full VMEM footprint fits the budget."""
    sub = max(8, 32 // itemsize)              # sublane packing: 8 f32, 16 bf16
    # Footprint per row: 2 double-buffered input tiles + 2 double-buffered output
    # tiles (native dtype) + ~2 live full-block f32 temporaries inside the kernel.
    per_row = (4 * itemsize + 2 * 4) * d
    tile = max(sub, buf_budget // per_row)
    tile = min(tile, 2048)
    rows_rounded = ((n_rows + sub - 1) // sub) * sub
    tile = min(tile, rows_rounded)
    tile = max(sub, (tile // sub) * sub)
    # Only manufacture extra grid steps when there is >1 TensorCore to feed.
    if num_cores > 1:
        min_steps = 2 * num_cores
        while tile > sub and pl.cdiv(n_rows, tile) < min_steps and n_rows >= min_steps * sub:
            tile = max(sub, ((tile // 2) // sub) * sub)
    return tile


# ----------------------------------------------------------------------------
# Wrappers
# ----------------------------------------------------------------------------
def _layer_norm_xla(x, weight, bias):
    """Plain XLA LayerNorm (used for tiny embed dims where lanes would be masked)."""
    x32 = x.astype(jnp.float32)
    mean = jnp.mean(x32, axis=-1, keepdims=True)
    var = jnp.mean(jnp.square(x32 - mean), axis=-1, keepdims=True)
    y = (x32 - mean) * jax.lax.rsqrt(var + EPS) * weight + bias
    return y.astype(x.dtype)


def pallas_layer_norm(x, weight, bias):
    """LayerNorm over the last axis of x (any leading shape)."""
    orig_shape = x.shape
    D = orig_shape[-1]

    if D < 128:
        # TODO(synk): pack several logical rows into the 128-lane dim with a
        # segmented in-block reduction instead of falling back to XLA.
        return _layer_norm_xla(x, weight, bias)

    x2 = x.reshape(-1, D)                     # collapse leading dims; no data movement
    R = x2.shape[0]
    itemsize = jnp.dtype(x.dtype).itemsize

    buf_budget, vmem_limit, num_cores = _vmem_config()
    tile_rows = _choose_tile_rows(R, D, itemsize, buf_budget, num_cores)
    grid = (pl.cdiv(R, tile_rows),)           # boundary block is OOB-masked (no pad copies)

    w2 = weight.reshape(1, D)
    b2 = bias.reshape(1, D)

    # TODO(synk): if xprof on v7x shows one idle TensorCore, switch this axis to
    # pltpu.CORE_PARALLEL (or a core_map mesh); "parallel" is the standard
    # megacore-sharding annotation and is a no-op on single-TC chips.
    out = pl.pallas_call(
        _layernorm_kernel,
        out_shape=jax.ShapeDtypeStruct((R, D), x.dtype),
        grid_spec=pltpu.PrefetchScalarGridSpec(
            num_scalar_prefetch=0,
            grid=grid,
            in_specs=[
                pl.BlockSpec((tile_rows, D), lambda i: (i, 0)),
                pl.BlockSpec((1, D), lambda i: (0, 0)),   # constant index_map: fetched once
                pl.BlockSpec((1, D), lambda i: (0, 0)),
            ],
            out_specs=pl.BlockSpec((tile_rows, D), lambda i: (i, 0)),
        ),
        compiler_params=pltpu.CompilerParams(
            dimension_semantics=("parallel",),
            vmem_limit_bytes=vmem_limit,
        ),
    )(x2, w2, b2)

    return out.reshape(orig_shape)


class MaybeLayerNorm:
    """JAX port of fairseq MaybeLayerNorm; LayerNorm hot path runs in Pallas."""

    def __init__(self, embed_dim, normalize_before):
        self.embed_dim = embed_dim
        self.normalize_before = normalize_before
        # Deterministic init identical to nn.LayerNorm / FusedLayerNorm defaults.
        self.weight = jnp.ones((embed_dim,), jnp.float32)
        self.bias = jnp.zeros((embed_dim,), jnp.float32)

    def __call__(self, x, before=False, after=False):
        assert before ^ after
        if after ^ self.normalize_before:
            return pallas_layer_norm(x, self.weight, self.bias)
        else:
            return x


# ----------------------------------------------------------------------------
# Reference + tests
# ----------------------------------------------------------------------------
def _reference_ln(x, w, b):
    x32 = x.astype(jnp.float32)
    mean = jnp.mean(x32, axis=-1, keepdims=True)
    var = jnp.mean((x32 - mean) ** 2, axis=-1, keepdims=True)
    return (x32 - mean) * jax.lax.rsqrt(var + EPS) * w + b


if __name__ == "__main__":
    key = jax.random.PRNGKey(0)
    k1, k2, k3, k4 = jax.random.split(key, 4)

    # 1) Lane-dense case: embed_dim multiple of 128 (fairseq T x B x C layout).
    seq, batch, embed = 8, 2, 128
    x = jax.random.normal(k1, (seq, batch, embed), dtype=jnp.float32)
    mln = MaybeLayerNorm(embed_dim=embed, normalize_before=True)
    y = jax.block_until_ready(mln(x, before=True))          # LayerNorm applied
    ref = _reference_ln(x, mln.weight, mln.bias)
    assert jnp.allclose(y, ref, atol=1e-4, rtol=1e-4)
    y_id = jax.block_until_ready(mln(x, after=True))         # identity passthrough
    assert jnp.array_equal(y_id, x)

    # 2) Boundary-block case: row count not a multiple of the sublane-aligned tile.
    xb = jax.random.normal(k2, (7, 3, 128), dtype=jnp.float32)
    yb = jax.block_until_ready(mln(xb, before=True))
    refb = _reference_ln(xb, mln.weight, mln.bias)
    assert jnp.allclose(yb, refb, atol=1e-4, rtol=1e-4)

    # 3) bf16 input (16-row sublane packing; f32 stats in registers).
    xh = jax.random.normal(k3, (16, 1, 128), dtype=jnp.bfloat16)
    yh = jax.block_until_ready(mln(xh, before=True))
    refh = _reference_ln(xh, mln.weight, mln.bias)
    assert yh.dtype == jnp.bfloat16
    assert jnp.allclose(yh.astype(jnp.float32), refh, atol=6e-2, rtol=6e-2)

    # 4) Tiny embed dim (D < 128): XLA fallback path + identity branch.
    xs = jax.random.normal(k4, (5, 3, 32), dtype=jnp.float32)
    mln_s = MaybeLayerNorm(embed_dim=32, normalize_before=False)
    ys = jax.block_until_ready(mln_s(xs, after=True))         # LayerNorm applied (fallback)
    refs = _reference_ln(xs, mln_s.weight, mln_s.bias)
    assert jnp.allclose(ys, refs, atol=1e-4, rtol=1e-4)
    assert jnp.array_equal(mln_s(xs, before=True), xs)        # identity passthrough

    print("KERNEL_OK")
</pallas_src>

<mosaic_0001>
module attributes {stable_mosaic.version = 11 : i64} {
  func.func @_layernorm_kernel(%arg0: i32, %arg1: memref<16x128xf32, #tpu.memory_space<vmem>>, %arg2: memref<1x128xf32, #tpu.memory_space<vmem>>, %arg3: memref<1x128xf32, #tpu.memory_space<vmem>>, %arg4: memref<16x128xf32, #tpu.memory_space<vmem>>) attributes {dimension_semantics = [#tpu.dimension_semantics<parallel>], iteration_bounds = array<i64: 1>, scalar_prefetch = 0 : i64, scratch_operands = 0 : i64, tpu.core_type = #tpu.core_type<tc>, window_params = [{transform_indices = @transform_0, window_bounds = array<i64: 16, 128>}, {pipeline_mode = #tpu.pipeline_mode<synchronous>, transform_indices = @transform_1, window_bounds = array<i64: 1, 128>}, {pipeline_mode = #tpu.pipeline_mode<synchronous>, transform_indices = @transform_2, window_bounds = array<i64: 1, 128>}, {transform_indices = @transform_3, window_bounds = array<i64: 16, 128>}]} {
    %c0 = arith.constant 0 : index
    %c0_0 = arith.constant 0 : index
    %0 = vector.load %arg1[%c0, %c0_0] : memref<16x128xf32, #tpu.memory_space<vmem>>, vector<16x128xf32>
    %cst = arith.constant dense<0.000000e+00> : vector<16xf32>
    %1 = vector.multi_reduction <add>, %0, %cst [1] : vector<16x128xf32> to vector<16xf32>
    %2 = vector.shape_cast %1 : vector<16xf32> to vector<16x1xf32>
    %cst_1 = arith.constant 1.280000e+02 : f32
    %3 = vector.broadcast %cst_1 : f32 to vector<16x1xf32>
    %4 = arith.divf %2, %3 : vector<16x1xf32>
    %5 = arith.mulf %0, %0 : vector<16x128xf32>
    %cst_2 = arith.constant dense<0.000000e+00> : vector<16xf32>
    %6 = vector.multi_reduction <add>, %5, %cst_2 [1] : vector<16x128xf32> to vector<16xf32>
    %7 = vector.shape_cast %6 : vector<16xf32> to vector<16x1xf32>
    %cst_3 = arith.constant 1.280000e+02 : f32
    %8 = vector.broadcast %cst_3 : f32 to vector<16x1xf32>
    %9 = arith.divf %7, %8 : vector<16x1xf32>
    %10 = arith.mulf %4, %4 : vector<16x1xf32>
    %11 = arith.subf %9, %10 : vector<16x1xf32>
    %cst_4 = arith.constant 9.99999974E-6 : f32
    %12 = vector.broadcast %cst_4 : f32 to vector<16x1xf32>
    %13 = arith.addf %11, %12 : vector<16x1xf32>
    %14 = math.rsqrt %13 : vector<16x1xf32>
    %c0_5 = arith.constant 0 : index
    %c0_6 = arith.constant 0 : index
    %15 = vector.load %arg2[%c0_5, %c0_6] : memref<1x128xf32, #tpu.memory_space<vmem>>, vector<1x128xf32>
    %c0_7 = arith.constant 0 : index
    %c0_8 = arith.constant 0 : index
    %16 = vector.load %arg3[%c0_7, %c0_8] : memref<1x128xf32, #tpu.memory_space<vmem>>, vector<1x128xf32>
    %17 = vector.broadcast %4 : vector<16x1xf32> to vector<16x128xf32>
    %18 = arith.subf %0, %17 : vector<16x128xf32>
    %19 = vector.broadcast %14 : vector<16x1xf32> to vector<16x128xf32>
    %20 = arith.mulf %18, %19 : vector<16x128xf32>
    %21 = vector.broadcast %15 : vector<1x128xf32> to vector<16x128xf32>
    %22 = arith.mulf %20, %21 : vector<16x128xf32>
    %23 = vector.broadcast %16 : vector<1x128xf32> to vector<16x128xf32>
    %24 = arith.addf %22, %23 : vector<16x128xf32>
    %c0_9 = arith.constant 0 : index
    %c0_10 = arith.constant 0 : index
    %25 = vector.load %arg4[%c0_9, %c0_10] : memref<16x128xf32, #tpu.memory_space<vmem>>, vector<16x128xf32>
    tpu.vector_store %arg4[%c0_9, %c0_10], %24 {strides = array<i32>} : memref<16x128xf32, #tpu.memory_space<vmem>>, vector<16x128xf32>,
    return
  }
  func.func @transform_0(%arg0: i32) -> (i32, i32) {
    %c0_i32 = arith.constant 0 : i32
    %c0_i32_0 = arith.constant 0 : i32
    return %arg0, %c0_i32 : i32, i32
  }
  func.func @transform_1(%arg0: i32) -> (i32, i32) {
    %c0_i32 = arith.constant 0 : i32
    %c0_i32_0 = arith.constant 0 : i32
    %c0_i32_1 = arith.constant 0 : i32
    return %c0_i32, %c0_i32_0 : i32, i32
  }
  func.func @transform_2(%arg0: i32) -> (i32, i32) {
    %c0_i32 = arith.constant 0 : i32
    %c0_i32_0 = arith.constant 0 : i32
    %c0_i32_1 = arith.constant 0 : i32
    return %c0_i32, %c0_i32_0 : i32, i32
  }
  func.func @transform_3(%arg0: i32) -> (i32, i32) {
    %c0_i32 = arith.constant 0 : i32
    %c0_i32_0 = arith.constant 0 : i32
    return %arg0, %c0_i32 : i32, i32
  }
}

</mosaic_0001>

<llo_original>
// kernel: tpu_custom_call.1
$region0: #{tpu_custom_call.1}
  #allocation0 [shape = 'u32[]', space=smem, size = 0x4, offset = 0x4, fixed_abs, tag = 'smem constant byte address 0x4 - core index']
  #allocation1 [shape = 'u32[144,128]{1,0:T(1,128)}', space=vmem, size = 0x12000, scoped, tag = 'internal scratch']
  %s0 = inlined_call_operand.hbm [shape: f32[16,128], index: 0, kind: input, shape index: {}]
  %s1 = inlined_call_operand.hbm [shape: f32[1,128], index: 1, kind: input, shape index: {}]
  %s2 = inlined_call_operand.hbm [shape: f32[1,128], index: 2, kind: input, shape index: {}]
  %s3 = inlined_call_operand.hbm [shape: f32[16,128], index: 3, kind: output, shape index: {}]
  %s4 = sld [smem:[#allocation0]]
  $region34: #{tpu_custom_call.1} parent=0
    _
  %s6 = ssub.s32 1, %s4
  %s7 = scalar_select 0, %s6, %s4
  $region1: #{tpu_custom_call.1} parent=0
    #allocation2 [shape = 'u8[8192]{0}', space=vmem, size = 0x2000, scoped, tag = 'input window, operand 0, single buffered']
    #allocation3 [shape = 's32[1]{0}', space=sflag, size = 0x4, scoped, tag = 'scoped memory for tpu_custom_call.1']
    #allocation4 [shape = 's32[1]{0}', space=sflag, size = 0x4, scoped, tag = 'scoped memory for tpu_custom_call.1']
    #allocation5 [shape = 'u8[512]{0}', space=vmem, size = 0x400, scoped, tag = 'input window, operand 1, single buffered']
    #allocation6 [shape = 's32[1]{0}', space=sflag, size = 0x4, scoped, tag = 'scoped memory for tpu_custom_call.1']
    #allocation7 [shape = 'u8[512]{0}', space=vmem, size = 0x400, scoped, tag = 'input window, operand 2, single buffered']
    #allocation8 [shape = 'u8[8192]{0}', space=vmem, size = 0x2000, scoped, tag = 'output window, operand 0, single buffered']
    %8 = vsyncpa [#allocation3], 0
    %9 = vsyncpa [#allocation6], 0
    %10 = vsyncpa [#allocation4], 0
    // Predicated region
    $region2: #{tpu_custom_call.1} parent=1 // pred_check
      _
    $region3: #{tpu_custom_call.1} parent=1 // pred_check_branch
      %12 = sbr.rel (0) target = $region5
    $region4: #{tpu_custom_call.1} parent=1 // pred_region
      %s14 = ssub.s32 256, 256
      %15 = vsyncadd [#allocation3], %s14
      %s16 = sshll.u32 [#allocation2], 4
      %s17 = int_to_ptr.vmem [resolvable:$true] %s16
      %22 = dma.hbm_to_vmem [thread:$0]  %s0, 256, %s17, [#allocation3], 128, 128, 8
    $region5: #{tpu_custom_call.1} parent=1 // pred_fallthru
      _
    // Predicated region
    $region6: #{tpu_custom_call.1} parent=1 // pred_check
      _
    $region7: #{tpu_custom_call.1} parent=1 // pred_check_branch
      %24 = sbr.rel (0) target = $region9
    $region8: #{tpu_custom_call.1} parent=1 // pred_region
      %s26 = ssub.s32 16, 16
      %27 = vsyncadd [#allocation6], %s26
      %s29 = sshll.u32 [#allocation5], 4
      %s30 = int_to_ptr.vmem [resolvable:$true] %s29
      %32 = dma.hbm_to_vmem [thread:$0]  %s1, 16, %s30, [#allocation6]
    $region9: #{tpu_custom_call.1} parent=1 // pred_fallthru
      _
    // Predicated region
    $region10: #{tpu_custom_call.1} parent=1 // pred_check
      _
    $region11: #{tpu_custom_call.1} parent=1 // pred_check_branch
      %34 = sbr.rel (0) target = $region13
    $region12: #{tpu_custom_call.1} parent=1 // pred_region
      %s36 = ssub.s32 16, 16
      %37 = vsyncadd [#allocation6], %s36
      %s39 = sshll.u32 [#allocation7], 4
      %s40 = int_to_ptr.vmem [resolvable:$true] %s39
      %42 = dma.hbm_to_vmem [thread:$0]  %s2, 16, %s40, [#allocation6]
    $region13: #{tpu_custom_call.1} parent=1 // pred_fallthru
      _
    // Predicated region
    $region14: #{tpu_custom_call.1} parent=1 // pred_check
      _
    $region15: #{tpu_custom_call.1} parent=1 // pred_check_branch
      %44 = sbr.rel (0) target = $region17
    $region16: #{tpu_custom_call.1} parent=1 // pred_region
      %45 = dma.done [#allocation3], 256
    $region17: #{tpu_custom_call.1} parent=1 // pred_fallthru
      _
    // Predicated region
    $region18: #{tpu_custom_call.1} parent=1 // pred_check
      _
    $region19: #{tpu_custom_call.1} parent=1 // pred_check_branch
      %47 = sbr.rel (0) target = $region21
    $region20: #{tpu_custom_call.1} parent=1 // pred_region
      %48 = dma.done [#allocation6], 16
    $region21: #{tpu_custom_call.1} parent=1 // pred_fallthru
      _
    // Predicated region
    $region22: #{tpu_custom_call.1} parent=1 // pred_check
      _
    $region23: #{tpu_custom_call.1} parent=1 // pred_check_branch
      %50 = sbr.rel (0) target = $region25
    $region24: #{tpu_custom_call.1} parent=1 // pred_region
      %51 = dma.done [#allocation6], 16
    $region25: #{tpu_custom_call.1} parent=1 // pred_fallthru
      _
    %v52 = vld [vmem:[#allocation2] sm:$0xff]
    %v53 = vld [vmem:[#allocation2 + $0x8] sm:$0xff]
    %54 = vadd.xlane.f32.xlu0 %v52
    %v55 = vpop.xlane.xlu0 %54
    %56 = vadd.xlane.f32.xlu0 %v53
    %v57 = vpop.xlane.xlu0 %56
    %v58 = vrcp.pop 128.0
    %v59 = vmul.f32 %v55, %v58
    %v60 = vmul.f32 %v57, %v58
    %v61 = vmul.f32 %v52, %v52
    %v62 = vmul.f32 %v53, %v53
    %63 = vadd.xlane.f32.xlu0 %v61
    %v64 = vpop.xlane.xlu0 %63
    %65 = vadd.xlane.f32.xlu0 %v62
    %v66 = vpop.xlane.xlu0 %65
    %v67 = vmul.f32 %v64, %v58
    %v68 = vmul.f32 %v66, %v58
    %v69 = vmul.f32 %v59, %v59
    %v70 = vmul.f32 %v60, %v60
    %v71 = vsub.f32 %v67, %v69
    %v72 = vsub.f32 %v68, %v70
    %v73 = vadd.f32 %v71, 1e-05
    %v74 = vadd.f32 %v72, 1e-05
    %v75 = vrsqrt.pop %v73
    %v76 = vrsqrt.pop %v74
    %v77 = vld [vmem:[#allocation5] sm:$0x1]
    %v78 = vld [vmem:[#allocation7] sm:$0x1]
    %v79 = vsub.f32 %v52, %v59
    %v80 = vsub.f32 %v53, %v60
    %v81 = vmul.f32 %v79, %v75
    %v82 = vmul.f32 %v80, %v76
    %v84 = vlaneseq
    %v85 = vshrl.u32 %v84, 7
    %v86 = vsub.s32 0, %v85
    %v87 = vrot.slane %v77, %v86
    %v89 = vmul.f32 %v81, %v87
    %v90 = vmul.f32 %v82, %v87
    %v92 = vlaneseq
    %v93 = vshrl.u32 %v92, 7
    %v94 = vsub.s32 0, %v93
    %v95 = vrot.slane %v78, %v94
    %v97 = vadd.f32 %v89, %v95
    %v98 = vadd.f32 %v90, %v95
    %99 = vst [vmem:[#allocation8] sm:$0xff] %v97
    %100 = vst [vmem:[#allocation8 + $0x8] sm:$0xff] %v98
    // Predicated region
    $region26: #{tpu_custom_call.1} parent=1 // pred_check
      _
    $region27: #{tpu_custom_call.1} parent=1 // pred_check_branch
      %102 = sbr.rel (0) target = $region29
    $region28: #{tpu_custom_call.1} parent=1 // pred_region
      %s104 = ssub.s32 256, 256
      %105 = vsyncadd [#allocation4], %s104
      %s106 = sshll.u32 [#allocation8], 4
      %s107 = int_to_ptr.vmem [resolvable:$true] %s106
      %112 = dma.vmem_to_hbm [thread:$0]  %s107, 256, %s3, [#allocation4], 128, 128, 8
    $region29: #{tpu_custom_call.1} parent=1 // pred_fallthru
      _
    // Predicated region
    $region30: #{tpu_custom_call.1} parent=1 // pred_check
      _
    $region31: #{tpu_custom_call.1} parent=1 // pred_check_branch
      %114 = sbr.rel (0) target = $region33
    $region32: #{tpu_custom_call.1} parent=1 // pred_region
      %115 = dma.done [#allocation4], 256
    $region33: #{tpu_custom_call.1} parent=1 // pred_fallthru
      _
    %116 = vsyncpa [#allocation3], 1
    %117 = vsyncpa [#allocation6], 1
    %118 = vsyncpa [#allocation4], 1

</llo_original>
